<compile_context>
chip_gen: v5e
topology: v5e:2x2
jax: 0.10.0
libtpu: 0.0.40
codegen_flags: <defaults>
</compile_context>

<pallas_src>
import jax
import jax.numpy as jnp
from jax.experimental import pallas as pl
from jax.experimental.pallas import tpu as pltpu


def _outconv_kernel(x_ref, w_ref, o_ref):
    # x_ref: (C_in,  tile_hw)  lane-dense spatial tile of one batch image
    # w_ref: (C_out, C_in)     grid-invariant weight (tiny, stays resident)
    # o_ref: (C_out, tile_hw)  lane-dense output tile
    o_ref[...] = jnp.dot(
        w_ref[...], x_ref[...], preferred_element_type=jnp.float32
    ).astype(o_ref.dtype)


def _round_up(x, m):
    return (x + m - 1) // m * m


def _pick_tile_hw(hw, c_in, c_out, dtype_bytes, *, target=2048,
                  vmem_budget=12 * 1024 * 1024):
    """Largest multiple-of-128 spatial tile <= target whose double-buffered
    VMEM footprint (including sublane padding of the tiny channel dims) stays
    under the most conservative scoped-VMEM default (v5e: 16 MiB)."""
    tile = min(_round_up(target, 128), _round_up(hw, 128))
    ci = _round_up(c_in, 8)
    co = _round_up(c_out, 8)
    w_bytes = 2 * co * _round_up(c_in, 128) * dtype_bytes  # 2x-buffered weight

    def footprint(t):
        # 2x-buffered activation block + 2x-buffered output block + weight.
        return 2 * t * (ci + co) * dtype_bytes + w_bytes

    while tile > 128 and footprint(tile) > vmem_budget:
        tile -= 128
    return max(tile, 128)


@jax.jit
def out_conv(x_nchw, weight_oihw):
    """1x1 conv, bias=False.  x: (N, C_in, H, W); weight: (C_out, C_in, 1, 1)."""
    n, c_in, h, w = x_nchw.shape
    c_out = weight_oihw.shape[0]
    hw = h * w
    dtype_bytes = jnp.dtype(x_nchw.dtype).itemsize

    tile_hw = _pick_tile_hw(hw, c_in, c_out, dtype_bytes)

    # Free reshapes: no data movement, kernel works in the native NCHW order.
    x_r = x_nchw.reshape(n, c_in, hw)
    w_mat = weight_oihw.reshape(c_out, c_in).astype(x_nchw.dtype)

    grid = (n, pl.cdiv(hw, tile_hw))

    y = pl.pallas_call(
        _outconv_kernel,
        out_shape=jax.ShapeDtypeStruct((n, c_out, hw), x_nchw.dtype),
        grid_spec=pltpu.PrefetchScalarGridSpec(
            num_scalar_prefetch=0,
            grid=grid,
            in_specs=[
                # Batch dim squeezed out of the kernel view; spatial on lanes.
                # Partial final block (hw % tile_hw != 0) is handled by Pallas'
                # masked edge blocks; columns are independent so it is safe.
                pl.BlockSpec((None, c_in, tile_hw), lambda b, j: (b, 0, j)),
                # Grid-invariant weight: constant block index, fetched once.
                pl.BlockSpec((c_out, c_in), lambda b, j: (0, 0)),
            ],
            out_specs=pl.BlockSpec((None, c_out, tile_hw), lambda b, j: (b, 0, j)),
        ),
        compiler_params=pltpu.CompilerParams(
            # Both grid axes independent: lets v7x shard them across its 2 TCs;
            # harmless on single-TC v5e/v6e.
            dimension_semantics=("parallel", "parallel"),
        ),
    )(x_r, w_mat)

    return y.reshape(n, c_out, h, w)


if __name__ == "__main__":
    key = jax.random.PRNGKey(0)
    kx, kw = jax.random.split(key)

    N, C_IN, C_OUT, H, W = 2, 4, 3, 16, 16

    x = jax.random.normal(kx, (N, C_IN, H, W), dtype=jnp.float32)
    # Matches nn.Conv2d weight shape (C_out, C_in, 1, 1), bias=False per spec.
    weight = jax.random.normal(kw, (C_OUT, C_IN, 1, 1), dtype=jnp.float32) * 0.1

    y = jax.block_until_ready(out_conv(x, weight))

    # Plain-JAX reference of the 1x1 conv.
    y_ref = jnp.einsum("nchw,oc->nohw", x, weight.reshape(C_OUT, C_IN))
    assert y.shape == (N, C_OUT, H, W)
    assert jnp.allclose(y, y_ref, atol=1e-5, rtol=1e-5)

    print("KERNEL_OK")
</pallas_src>

<mosaic_0001>
module attributes {stable_mosaic.version = 11 : i64} {
  func.func @_outconv_kernel(%arg0: i32, %arg1: i32, %arg2: memref<1x4x256xf32, #tpu.memory_space<vmem>>, %arg3: memref<3x4xf32, #tpu.memory_space<vmem>>, %arg4: memref<1x3x256xf32, #tpu.memory_space<vmem>>) attributes {dimension_semantics = [#tpu.dimension_semantics<parallel>, #tpu.dimension_semantics<parallel>], iteration_bounds = array<i64: 2, 1>, scalar_prefetch = 0 : i64, scratch_operands = 0 : i64, tpu.core_type = #tpu.core_type<tc>, window_params = [{transform_indices = @transform_0, window_bounds = array<i64: 1, 4, 256>}, {pipeline_mode = #tpu.pipeline_mode<synchronous>, transform_indices = @transform_1, window_bounds = array<i64: 3, 4>}, {transform_indices = @transform_2, window_bounds = array<i64: 1, 3, 256>}]} {
    %c0 = arith.constant 0 : index
    %c0_0 = arith.constant 0 : index
    %0 = vector.load %arg3[%c0, %c0_0] : memref<3x4xf32, #tpu.memory_space<vmem>>, vector<3x4xf32>
    %c0_1 = arith.constant 0 : index
    %c0_2 = arith.constant 0 : index
    %c0_3 = arith.constant 0 : index
    %1 = vector.load %arg2[%c0_1, %c0_2, %c0_3] : memref<1x4x256xf32, #tpu.memory_space<vmem>>, vector<1x4x256xf32>
    %2 = vector.shape_cast %1 : vector<1x4x256xf32> to vector<4x256xf32>
    %cst = arith.constant dense<0.000000e+00> : vector<3x256xf32>
    %3 = tpu.matmul %0, %2, %cst {dimension_numbers = #tpu.dot_dimension_numbers<[1], [0], [0], [1], [0, 0, 1, 1], [], []>} : vector<3x4xf32>, vector<4x256xf32>, vector<3x256xf32> -> vector<3x256xf32>
    %c0_4 = arith.constant 0 : index
    %c0_5 = arith.constant 0 : index
    %c0_6 = arith.constant 0 : index
    %4 = vector.load %arg4[%c0_4, %c0_5, %c0_6] : memref<1x3x256xf32, #tpu.memory_space<vmem>>, vector<1x3x256xf32>
    %5 = vector.shape_cast %4 : vector<1x3x256xf32> to vector<3x256xf32>
    %6 = vector.shape_cast %3 : vector<3x256xf32> to vector<1x3x256xf32>
    tpu.vector_store %arg4[%c0_4, %c0_5, %c0_6], %6 {strides = array<i32>} : memref<1x3x256xf32, #tpu.memory_space<vmem>>, vector<1x3x256xf32>,
    return
  }
  func.func @transform_0(%arg0: i32, %arg1: i32) -> (i32, i32, i32) {
    %c0_i32 = arith.constant 0 : i32
    %c0_i32_0 = arith.constant 0 : i32
    return %arg0, %c0_i32, %arg1 : i32, i32, i32
  }
  func.func @transform_1(%arg0: i32, %arg1: i32) -> (i32, i32) {
    %c0_i32 = arith.constant 0 : i32
    %c0_i32_0 = arith.constant 0 : i32
    %c0_i32_1 = arith.constant 0 : i32
    return %c0_i32, %c0_i32_0 : i32, i32
  }
  func.func @transform_2(%arg0: i32, %arg1: i32) -> (i32, i32, i32) {
    %c0_i32 = arith.constant 0 : i32
    %c0_i32_0 = arith.constant 0 : i32
    return %arg0, %c0_i32, %arg1 : i32, i32, i32
  }
}

</mosaic_0001>

<llo_original>
// kernel: out_conv.1
$region0: #{out_conv.1}
  #allocation0 [shape = 'u32[]', space=smem, size = 0x4, offset = 0x4, fixed_abs, tag = 'smem constant byte address 0x4 - core index']
  #allocation1 [shape = 'u32[72,128]{1,0:T(1,128)}', space=vmem, size = 0x9000, scoped, tag = 'internal scratch']
  %s0 = inlined_call_operand.vmem [shape: f32[2,4,256], index: 0, kind: input, shape index: {}]
  %s1 = inlined_call_operand.vmem [shape: f32[3,4], index: 1, kind: input, shape index: {}]
  %s2 = inlined_call_operand.vmem [shape: f32[2,3,256], index: 2, kind: output, shape index: {}]
  %s3 = sld [smem:[#allocation0]]
  $region41: #{out_conv.1} parent=0
    _
  %s5 = ssub.s32 1, %s3
  %s6 = scalar_select 0, %s5, %s3
  loop: start=0, step=1, limit=4
  $region2: #{out_conv.1} parent=0 // loop_pre_header
    _
  $region3: #{out_conv.1} parent=0 // loop_header
    %s8 = sphi 0, %s12
    %p9 = scmp.ge.s32.totalorder %s8, 4
    %s15 = sphi 0, %s27
    %s16 = sphi 0, %s23
    %s17 = sphi 0, %s15
    %s18 = sphi 0, %s16
    %s19 = sphi 0, %s17
    %s20 = sphi 0, %s18
    %s32 = sphi 0, %s34
    %s35 = sphi 0, %s32
    %s36 = sphi 0, %s35
    %s52 = sphi 0, %s36
    %s56 = sphi 0, %s56
    %s58 = sphi 0, %s56
    %s59 = sphi 0, %s58
    %s73 = sphi 0, %s59
    %s81 = sphi 0, %s83
    %s84 = sphi 0, %s81
    %s85 = sphi 0, %s84
    %s101 = sphi 0, %s85
  $region4: #{out_conv.1} parent=0 // loop_header_branch
    %11 = sbr.rel (%p9) target = $region8
  $region5: #{out_conv.1} parent=0 // loop_body
    %s13 = ssub.s32 %s8, 1
    %s14 = ssub.s32 %s8, 2
    %s21 = sadd.s32 1, %s16
    %p22 = scmp.ge.s32.totalorder %s21, 1
    %s23 = scalar_select %p22, 0, %s21
    %s24 = sadd.s32 1, %s15
    %s25 = scalar_select %p22, %s24, %s15
    %p26 = scmp.ge.s32.totalorder %s25, 2
    %s27 = scalar_select %p26, 0, %s25
    %s28 = ssub.s32 %s15, %s27
    %s29 = ssub.s32 %s16, %s23
    %s30 = sor.u32 %s28, %s29
    %p31 = scmp.eq.s32.totalorder %s30, 0
    %s33 = sadd.s32 %s32, 1
    %s34 = scalar_select %p31, %s32, %s33
    %p37 = pneg %p31
    %p38 = scmp.eq.s32.totalorder %s8, 1
    %p39 = por %p37, %p38
    %p40 = scmp.ne.s32.totalorder %s32, %s35
    %p41 = scmp.eq.s32.totalorder %s8, 0
    %p42 = por %p40, %p41
    %p43 = scmp.ne.s32.totalorder %s32, %s35
    %p44 = scmp.eq.s32.totalorder %s13, 1
    %p45 = por %p43, %p44
    %p46 = scmp.ne.s32.totalorder %s35, %s36
    %p47 = scmp.eq.s32.totalorder %s13, 0
    %p48 = por %p46, %p47
    %p49 = scmp.ne.s32.totalorder %s35, %s36
    %p50 = scmp.eq.s32.totalorder %s14, 1
    %p51 = por %p49, %p50
    %p53 = scmp.ne.s32.totalorder %s36, %s52
    %p54 = scmp.eq.s32.totalorder %s14, 0
    %p55 = por %p53, %p54
    %s57 = sadd.s32 %s56, 1
    %p60 = scmp.eq.s32.totalorder %s8, 1
    %p61 = scmp.ne.s32.totalorder %s56, %s58
    %p62 = scmp.eq.s32.totalorder %s8, 0
    %p63 = por %p61, %p62
    %p64 = scmp.ne.s32.totalorder %s56, %s58
    %p65 = scmp.eq.s32.totalorder %s13, 1
    %p66 = por %p64, %p65
    %p67 = scmp.ne.s32.totalorder %s58, %s59
    %p68 = scmp.eq.s32.totalorder %s13, 0
    %p69 = por %p67, %p68
    %p70 = scmp.ne.s32.totalorder %s58, %s59
    %p71 = scmp.eq.s32.totalorder %s14, 1
    %p72 = por %p70, %p71
    %p74 = scmp.ne.s32.totalorder %s59, %s73
    %p75 = scmp.eq.s32.totalorder %s14, 0
    %p76 = por %p74, %p75
    %s77 = ssub.s32 %s15, %s27
    %s78 = ssub.s32 %s16, %s23
    %s79 = sor.u32 %s77, %s78
    %p80 = scmp.eq.s32.totalorder %s79, 0
    %s82 = sadd.s32 %s81, 1
    %s83 = scalar_select %p80, %s81, %s82
    %p86 = pneg %p80
    %p87 = scmp.eq.s32.totalorder %s8, 1
    %p88 = por %p86, %p87
    %p89 = scmp.ne.s32.totalorder %s81, %s84
    %p90 = scmp.eq.s32.totalorder %s8, 0
    %p91 = por %p89, %p90
    %p92 = scmp.ne.s32.totalorder %s81, %s84
    %p93 = scmp.eq.s32.totalorder %s13, 1
    %p94 = por %p92, %p93
    %p95 = scmp.ne.s32.totalorder %s84, %s85
    %p96 = scmp.eq.s32.totalorder %s13, 0
    %p97 = por %p95, %p96
    %p98 = scmp.ne.s32.totalorder %s84, %s85
    %p99 = scmp.eq.s32.totalorder %s14, 1
    %p100 = por %p98, %p99
    %p102 = scmp.ne.s32.totalorder %s85, %s101
    %p103 = scmp.eq.s32.totalorder %s14, 0
    %p104 = por %p102, %p103
    %p105 = scmp.le.s32.totalorder 1, %s8
    %p106 = scmp.lt.s32.totalorder %s8, 3
    %p107 = pnand %p105, %p106
    %p108 = pneg %p107
    // Predicated region
    $region9: #{out_conv.1} parent=5 // pred_check
      _
    $region10: #{out_conv.1} parent=5 // pred_check_branch
      %110 = sbr.rel (%p107) target = $region12
    $region11: #{out_conv.1} parent=5 // pred_region
      %s111 = ssub.s32 %s8, 1
      // Predicated region
      $region13: #{out_conv.1} parent=11 // pred_check
        %p112 = pneg %p69
      $region14: #{out_conv.1} parent=11 // pred_check_branch
        %114 = sbr.rel (%p112) target = $region16
      $region15: #{out_conv.1} parent=11 // pred_region
        _
      $region16: #{out_conv.1} parent=11 // pred_fallthru
        _
    $region12: #{out_conv.1} parent=5 // pred_fallthru
      _
    %p115 = scmp.lt.s32.totalorder %s8, 2
    // Predicated region
    $region17: #{out_conv.1} parent=5 // pred_check
      %p116 = pneg %p115
    $region18: #{out_conv.1} parent=5 // pred_check_branch
      %118 = sbr.rel (%p116) target = $region20
    $region19: #{out_conv.1} parent=5 // pred_region
      // Predicated region
      $region21: #{out_conv.1} parent=19 // pred_check
        %p119 = pneg %p42
      $region22: #{out_conv.1} parent=19 // pred_check_branch
        %121 = sbr.rel (%p119) target = $region24
      $region23: #{out_conv.1} parent=19 // pred_region
        %s122 = smul.u32 2, %s16
        %p123 = scmp.lt.s32.totalorder %s15, 1
        %s124 = scalar_select %p123, %s15, 1
        %p125 = scmp.lt.s32.totalorder %s122, 1
        %s126 = scalar_select %p125, %s122, 1
        %s127 = smul.addr %s124, 2
        %s128 = sadd.s32 %s126, %s127
        %s129 = smul.addr %s128, 4
        %s130 = scalar_lea.vmem %s0, %s129
        %s131 = smul.u32 2, %s16
      $region24: #{out_conv.1} parent=19 // pred_fallthru
        _
    $region20: #{out_conv.1} parent=5 // pred_fallthru
      _
    %p132 = scmp.le.s32.totalorder 1, %s8
    %p133 = scmp.lt.s32.totalorder %s8, 3
    %p134 = pnand %p132, %p133
    %p135 = pneg %p134
    // Predicated region
    $region25: #{out_conv.1} parent=5 // pred_check
      _
    $region26: #{out_conv.1} parent=5 // pred_check_branch
      %137 = sbr.rel (%p134) target = $region28
    $region27: #{out_conv.1} parent=5 // pred_region
      %s138 = ssub.s32 %s8, 1
      %s139 = smul.u32 2, %s18
      %p140 = scmp.lt.s32.totalorder %s17, 1
      %s141 = scalar_select %p140, %s17, 1
      %p142 = scmp.lt.s32.totalorder %s139, 1
      %s143 = scalar_select %p142, %s139, 1
      %s144 = smul.addr %s141, 2
      %s145 = sadd.s32 %s143, %s144
      %s146 = smul.addr %s145, 4
      %s147 = scalar_lea.vmem %s0, %s146
      %p148 = pneg %p48
      %p149 = pneg %p45
      %p150 = pneg %p69
      %p151 = pneg %p66
      %p152 = pneg %p97
      %p153 = pneg %p94
      %s154 = smul.u32 2, %s18
      %p155 = scmp.lt.s32.totalorder %s17, 1
      %s156 = scalar_select %p155, %s17, 1
      %p157 = scmp.lt.s32.totalorder %s154, 1
      %s158 = scalar_select %p157, %s154, 1
      %s159 = smul.addr %s156, 2
      %s160 = sadd.s32 %s158, %s159
      %s161 = smul.addr %s160, 4
      %s162 = scalar_lea.vmem %s2, %s161
      %s163 = smul.u32 2, %s18
      %p164 = scmp.lt.s32.totalorder %s17, 1
      %s165 = scalar_select %p164, %s17, 1
      %p166 = scmp.lt.s32.totalorder %s163, 1
      %s167 = scalar_select %p166, %s163, 1
      %s168 = smul.addr %s165, 2
      %s169 = sadd.s32 %s167, %s168
      %s170 = smul.addr %s169, 4
      %s171 = scalar_lea.vmem %s0, %s170
      %s172 = smul.u32 2, %s18
      %s173 = smul.u32 2, %s18
      %p174 = scmp.lt.s32.totalorder %s17, 1
      %s175 = scalar_select %p174, %s17, 1
      %p176 = scmp.lt.s32.totalorder %s173, 1
      %s177 = scalar_select %p176, %s173, 1
      %s178 = smul.addr %s175, 2
      %s179 = sadd.s32 %s177, %s178
      %s180 = smul.addr %s179, 4
      %s181 = scalar_lea.vmem %s2, %s180
      %s182 = smul.u32 2, %s18
      %v183 = vld [vmem:[%s1] sm:$0x7]
      %v184 = vld [vmem:[%s171] sm:$0xff]
      %186 = vst [vmem:[#allocation1] ss:$2 sm:$0xff] %v184
      %v187 = vld.sshfl [vmem:[#allocation1] sm:$0xff pattern:$0x75316420]
      %v188 = vld.sshfl [vmem:[#allocation1 + $0x8] sm:$0xff pattern:$0x75316420]
      %vm189 = vcmask 31744
      %v191 = vsel %vm189, %v183, 0
      %vm193 = vcmask 1043456
      %v194 = vsel %vm193, %v187, 0
      %v196 = vsel %vm193, %v188, 0
      %198 = vmatpush.msra.mxu0 0.0
      %199 = vmatpush.msra.mxu0 0.0
      %200 = vmatpush.msra.mxu0 0.0
      %201 = vmatpush.msra.mxu0 0.0
      %202 = vmatpush.msra.mxu0 0.0
      %203 = vmatpush.msra.mxu0 0.0
      %204 = vmatpush.msra.mxu0 0.0
      %205 = vmatpush.msra.mxu0 0.0
      %206 = vmatpush.msra.mxu0 0.0
      %207 = vmatpush.msra.mxu0 0.0
      %208 = vmatpush.msra.mxu0 0.0
      %209 = vmatpush.msra.mxu0 0.0
      %210 = vmatpush.msra.mxu0 0.0
      %211 = vmatpush.msra.mxu0 0.0
      %212 = vmatpush.msra.mxu0 0.0
      %213 = vmatpush.msra.mxu0 %v194
      %214 = vmatmul.f32.gmra.mxu0 %v191
      %v215 = vpop.f32.mrf.mxu0
      %v216 = vadd.f32 0.0, %v215
      %217 = vdwg.mxu0
      %218 = vmatpush.msra.mxu0 0.0
      %219 = vmatpush.msra.mxu0 0.0
      %220 = vmatpush.msra.mxu0 0.0
      %221 = vmatpush.msra.mxu0 0.0
      %222 = vmatpush.msra.mxu0 0.0
      %223 = vmatpush.msra.mxu0 0.0
      %224 = vmatpush.msra.mxu0 0.0
      %225 = vmatpush.msra.mxu0 0.0
      %226 = vmatpush.msra.mxu0 0.0
      %227 = vmatpush.msra.mxu0 0.0
      %228 = vmatpush.msra.mxu0 0.0
      %229 = vmatpush.msra.mxu0 0.0
      %230 = vmatpush.msra.mxu0 0.0
      %231 = vmatpush.msra.mxu0 0.0
      %232 = vmatpush.msra.mxu0 0.0
      %233 = vmatpush.msra.mxu0 %v196
      %234 = vmatmul.f32.gmra.mxu0 %v191
      %v235 = vpop.f32.mrf.mxu0
      %v236 = vadd.f32 0.0, %v235
      %237 = vdwg.mxu0
      %v240 = vrot.slane %v236, 4
      %v241 = vsel %vm193, %v216, %v240
      %243 = vst [vmem:[%s181] sm:$0x77] %v241
      %s244 = smul.u32 2, %s18
      %p245 = scmp.lt.s32.totalorder %s17, 1
      %s246 = scalar_select %p245, %s17, 1
      %p247 = scmp.lt.s32.totalorder %s244, 1
      %s248 = scalar_select %p247, %s244, 1
      %s249 = smul.addr %s246, 2
      %s250 = sadd.s32 %s248, %s249
      %s251 = smul.addr %s250, 4
      %s252 = scalar_lea.vmem %s2, %s251
      // Predicated region
      $region29: #{out_conv.1} parent=27 // pred_check
        %p253 = pneg %p94
      $region30: #{out_conv.1} parent=27 // pred_check_branch
        %255 = sbr.rel (%p253) target = $region32
      $region31: #{out_conv.1} parent=27 // pred_region
        %s256 = smul.u32 2, %s18
      $region32: #{out_conv.1} parent=27 // pred_fallthru
        _
    $region28: #{out_conv.1} parent=5 // pred_fallthru
      _
    %p257 = scmp.le.s32.totalorder 2, %s8
    // Predicated region
    $region33: #{out_conv.1} parent=5 // pred_check
      %p258 = pneg %p257
    $region34: #{out_conv.1} parent=5 // pred_check_branch
      %260 = sbr.rel (%p258) target = $region36
    $region35: #{out_conv.1} parent=5 // pred_region
      %s261 = ssub.s32 %s8, 2
      // Predicated region
      $region37: #{out_conv.1} parent=35 // pred_check
        %p262 = pneg %p100
      $region38: #{out_conv.1} parent=35 // pred_check_branch
        %264 = sbr.rel (%p262) target = $region40
      $region39: #{out_conv.1} parent=35 // pred_region
        %s265 = smul.u32 2, %s20
        %p266 = scmp.lt.s32.totalorder %s19, 1
        %s267 = scalar_select %p266, %s19, 1
        %p268 = scmp.lt.s32.totalorder %s265, 1
        %s269 = scalar_select %p268, %s265, 1
        %s270 = smul.addr %s267, 2
        %s271 = sadd.s32 %s269, %s270
        %s272 = smul.addr %s271, 4
        %s273 = scalar_lea.vmem %s2, %s272
      $region40: #{out_conv.1} parent=35 // pred_fallthru
        _
    $region36: #{out_conv.1} parent=5 // pred_fallthru
      _
  $region6: #{out_conv.1} parent=0 // loop_footer
    %s12 = sadd.s32 1, %s8
  $region7: #{out_conv.1} parent=0 // loop_footer_branch
    %7 = sbr.rel target = $region3
  $region8: #{out_conv.1} parent=0 // loop_exit
    _

</llo_original>
